<compile_context>
chip_gen: v5e
topology: v5e:2x2
jax: 0.10.0
libtpu: 0.0.40
codegen_flags: <defaults>
</compile_context>

<pallas_src>
import jax
import jax.numpy as jnp
from jax.experimental import pallas as pl
from jax.experimental.pallas import tpu as pltpu

ALPHA = 0.5
BETA = 0.1
SOFTPLUS_THRESHOLD = 50.0  # nn.Softplus(beta=1, threshold=50)

LANES = 128
NUM_CORES = 2           # leading "parallel" grid axis -> both TCs on v7x
MAX_TILE_ROWS = 1024    # (1024,128) f32 block = 512 KiB; 2x f32 + 1x i8 inputs,
                        # double-buffered, ~2.25 MiB -> far under scoped VMEM.
PAD_DIFF = 1e30         # softplus(-1.0 * PAD_DIFF) == 0 exactly in f32


def _round_up(x, m):
    return ((x + m - 1) // m) * m


def _make_kernel(tile_rows):
    def kernel(diff_ref, sign_ref, code_ref, out_ref,
               a_sp, a_sp_pp, a_sp_nn, a_pp, a_nn):
        i = pl.program_id(1)   # row-tile / reduction axis

        @pl.when(i == 0)
        def _init():
            z = jnp.zeros_like(a_sp)
            a_sp[...] = z
            a_sp_pp[...] = z
            a_sp_nn[...] = z
            a_pp[...] = z
            a_nn[...] = z

        diff = diff_ref[...]
        sign = sign_ref[...]
        code = code_ref[...].astype(jnp.float32)   # 0=nn, 1/2=pn, 3=pp (pad=1)

        # softplus(-sign * diff) with PyTorch threshold semantics (x>50 -> x).
        x = -sign * diff
        sp = jnp.where(x > SOFTPLUS_THRESHOLD, x, jnp.log1p(jnp.exp(x)))

        # Group masks from the packed label code (padding -> neither group).
        pp = (code == 3.0).astype(jnp.float32)
        nn_m = (code == 0.0).astype(jnp.float32)

        def fold(v):  # (tile_rows,128) -> (8,128): pure vreg adds, no XLU.
            return v.reshape(tile_rows // 8, 8, LANES).sum(axis=0)

        a_sp[...] += fold(sp)            # padded sp is exactly 0
        a_sp_pp[...] += fold(sp * pp)
        a_sp_nn[...] += fold(sp * nn_m)
        a_pp[...] += fold(pp)
        a_nn[...] += fold(nn_m)

        @pl.when(i == pl.num_programs(1) - 1)
        def _finalize():
            out_ref[0, 0, :, :] = a_sp[...]
            out_ref[0, 1, :, :] = a_sp_pp[...]
            out_ref[0, 2, :, :] = a_sp_nn[...]
            out_ref[0, 3, :, :] = a_pp[...]
            out_ref[0, 4, :, :] = a_nn[...]

    return kernel


def pair_push_loss(diff, labels1, labels2, sign, alpha=ALPHA, beta=BETA,
                   max_tile_rows=MAX_TILE_ROWS):
    """diff, sign: [N] float; labels1, labels2: [N] in {0,1}. Returns scalar f32."""
    n = diff.shape[0]
    rows = max(1, -(-n // LANES))
    # Tile count first, then re-fit rows/tile (multiple of 32 for int8 packing)
    # so padding overhead stays small for any N.
    tiles_per_core = max(1, -(-rows // (NUM_CORES * max_tile_rows)))
    tile_rows = _round_up(max(1, -(-rows // (NUM_CORES * tiles_per_core))), 32)
    rows_padded = NUM_CORES * tiles_per_core * tile_rows
    n_pad = rows_padded * LANES - n

    def prep(x, dtype, pad_value):
        x = x.astype(dtype)
        x = jnp.pad(x, (0, n_pad), constant_values=pad_value)
        return x.reshape(rows_padded, LANES)

    d2 = prep(diff, jnp.float32, PAD_DIFF)   # padded softplus term == 0
    s2 = prep(sign, jnp.float32, 1.0)
    # Pack both labels into one int8 code: 1 B/pair HBM traffic. Pad with 1
    # ("pn" pair): inert for pp/nn accumulators; pn is derived from true N.
    code = labels1.astype(jnp.int8) + 2 * labels2.astype(jnp.int8)
    c2 = prep(code, jnp.int8, 1)

    data_map = lambda c, i: (c * tiles_per_core + i, 0)
    data_spec = pl.BlockSpec((tile_rows, LANES), data_map)

    partials = pl.pallas_call(
        _make_kernel(tile_rows),
        out_shape=jax.ShapeDtypeStruct((NUM_CORES, 5, 8, LANES), jnp.float32),
        grid_spec=pltpu.PrefetchScalarGridSpec(
            num_scalar_prefetch=0,
            grid=(NUM_CORES, tiles_per_core),
            in_specs=[data_spec, data_spec, data_spec],
            out_specs=pl.BlockSpec((1, 5, 8, LANES), lambda c, i: (c, 0, 0, 0)),
            scratch_shapes=[pltpu.VMEM((8, LANES), jnp.float32)] * 5,
        ),
        compiler_params=pltpu.CompilerParams(
            dimension_semantics=("parallel", "arbitrary"),
        ),
    )(d2, s2, c2)

    # Tiny epilogue: combine per-core partial slabs -> 5 scalars -> loss.
    sums = jnp.sum(partials, axis=(0, 2, 3))            # (5,)
    s_sp, s_pp, s_nn = sums[0], sums[1], sums[2]
    c_pp, c_nn = sums[3], sums[4]
    s_pn = s_sp - s_pp - s_nn
    c_pn = jnp.asarray(n, jnp.float32) - c_pp - c_nn

    def group_mean(s, c):
        # empty group contributes 0 (matches the PyTorch `if sum(...)` guards)
        return jnp.where(c > 0.0, s / jnp.maximum(c, 1.0), 0.0)

    return (alpha * group_mean(s_pp, c_pp)
            + (1.0 - alpha - beta) * group_mean(s_pn, c_pn)
            + beta * group_mean(s_nn, c_nn))


def _reference(diff, labels1, labels2, sign, alpha=ALPHA, beta=BETA):
    # pure-JAX reference of the PyTorch forward
    l1 = labels1.astype(jnp.float32)
    l2 = labels2.astype(jnp.float32)
    x = -sign * diff
    sp = jnp.where(x > 50.0, x, jnp.log1p(jnp.exp(jnp.minimum(x, 50.0))))
    eq = l1 == l2
    pp = eq & (l1 == 1)
    nn_m = eq & (l1 == 0)
    pn = ~eq

    def mm(mask):
        m = mask.astype(jnp.float32)
        c = jnp.sum(m)
        return jnp.where(c > 0, jnp.sum(sp * m) / jnp.maximum(c, 1.0), 0.0)

    return alpha * mm(pp) + (1 - alpha - beta) * mm(pn) + beta * mm(nn_m)


def _make_inputs(key, n):
    k1, k2, k3, k4 = jax.random.split(key, 4)
    diff = jax.random.normal(k1, (n,), dtype=jnp.float32) * 2.0
    sign = jnp.where(jax.random.bernoulli(k2, 0.5, (n,)), 1.0, -1.0).astype(jnp.float32)
    labels1 = jax.random.bernoulli(k3, 0.5, (n,)).astype(jnp.int8)
    labels2 = jax.random.bernoulli(k4, 0.5, (n,)).astype(jnp.int8)
    return diff, labels1, labels2, sign


if __name__ == "__main__":
    key = jax.random.PRNGKey(0)

    # Case 1: N not a multiple of 128 — exercises the pad-value tail handling.
    N = 300
    diff, labels1, labels2, sign = _make_inputs(key, N)
    loss = pair_push_loss(diff, labels1, labels2, sign)
    jax.block_until_ready(loss)
    ref = _reference(diff, labels1, labels2, sign)
    assert jnp.allclose(loss, ref, atol=1e-4, rtol=1e-4), (loss, ref)

    # Case 2: small tiles forced so the multi-tile accumulation path runs.
    N2 = 20000
    diff2, l1b, l2b, sign2 = _make_inputs(jax.random.PRNGKey(1), N2)
    loss2 = pair_push_loss(diff2, l1b, l2b, sign2, max_tile_rows=32)
    jax.block_until_ready(loss2)
    ref2 = _reference(diff2, l1b, l2b, sign2)
    assert jnp.allclose(loss2, ref2, atol=1e-4, rtol=1e-4), (loss2, ref2)

    print("KERNEL_OK")
</pallas_src>

<mosaic_0001>
module attributes {stable_mosaic.version = 11 : i64} {
  func.func @kernel(%arg0: i32, %arg1: i32, %arg2: memref<32x128xf32, #tpu.memory_space<vmem>>, %arg3: memref<32x128xf32, #tpu.memory_space<vmem>>, %arg4: memref<32x128xi8, #tpu.memory_space<vmem>>, %arg5: memref<1x5x8x128xf32, #tpu.memory_space<vmem>>, %arg6: memref<8x128xf32, #tpu.memory_space<vmem>>, %arg7: memref<8x128xf32, #tpu.memory_space<vmem>>, %arg8: memref<8x128xf32, #tpu.memory_space<vmem>>, %arg9: memref<8x128xf32, #tpu.memory_space<vmem>>, %arg10: memref<8x128xf32, #tpu.memory_space<vmem>>) attributes {dimension_semantics = [#tpu.dimension_semantics<parallel>, #tpu.dimension_semantics<arbitrary>], iteration_bounds = array<i64: 2, 1>, scalar_prefetch = 0 : i64, scratch_operands = 5 : i64, tpu.core_type = #tpu.core_type<tc>, window_params = [{transform_indices = @transform_0, window_bounds = array<i64: 32, 128>}, {transform_indices = @transform_1, window_bounds = array<i64: 32, 128>}, {transform_indices = @transform_2, window_bounds = array<i64: 32, 128>}, {transform_indices = @transform_3, window_bounds = array<i64: 1, 5, 8, 128>}]} {
    %c0_i32 = arith.constant 0 : i32
    %0 = arith.cmpi eq, %arg1, %c0_i32 : i32
    %1 = arith.extui %0 : i1 to i32
    %c0_i32_0 = arith.constant 0 : i32
    %2 = arith.cmpi ne, %1, %c0_i32_0 : i32
    scf.if %2 {
      %cst_36 = arith.constant 0.000000e+00 : f32
      %53 = vector.broadcast %cst_36 : f32 to vector<8x128xf32>
      %c0_37 = arith.constant 0 : index
      %c0_38 = arith.constant 0 : index
      %54 = vector.load %arg6[%c0_37, %c0_38] : memref<8x128xf32, #tpu.memory_space<vmem>>, vector<8x128xf32>
      tpu.vector_store %arg6[%c0_37, %c0_38], %53 {strides = array<i32>} : memref<8x128xf32, #tpu.memory_space<vmem>>, vector<8x128xf32>,
      %c0_39 = arith.constant 0 : index
      %c0_40 = arith.constant 0 : index
      %55 = vector.load %arg7[%c0_39, %c0_40] : memref<8x128xf32, #tpu.memory_space<vmem>>, vector<8x128xf32>
      tpu.vector_store %arg7[%c0_39, %c0_40], %53 {strides = array<i32>} : memref<8x128xf32, #tpu.memory_space<vmem>>, vector<8x128xf32>,
      %c0_41 = arith.constant 0 : index
      %c0_42 = arith.constant 0 : index
      %56 = vector.load %arg8[%c0_41, %c0_42] : memref<8x128xf32, #tpu.memory_space<vmem>>, vector<8x128xf32>
      tpu.vector_store %arg8[%c0_41, %c0_42], %53 {strides = array<i32>} : memref<8x128xf32, #tpu.memory_space<vmem>>, vector<8x128xf32>,
      %c0_43 = arith.constant 0 : index
      %c0_44 = arith.constant 0 : index
      %57 = vector.load %arg9[%c0_43, %c0_44] : memref<8x128xf32, #tpu.memory_space<vmem>>, vector<8x128xf32>
      tpu.vector_store %arg9[%c0_43, %c0_44], %53 {strides = array<i32>} : memref<8x128xf32, #tpu.memory_space<vmem>>, vector<8x128xf32>,
      %c0_45 = arith.constant 0 : index
      %c0_46 = arith.constant 0 : index
      %58 = vector.load %arg10[%c0_45, %c0_46] : memref<8x128xf32, #tpu.memory_space<vmem>>, vector<8x128xf32>
      tpu.vector_store %arg10[%c0_45, %c0_46], %53 {strides = array<i32>} : memref<8x128xf32, #tpu.memory_space<vmem>>, vector<8x128xf32>,
    } else {
    }
    %c0 = arith.constant 0 : index
    %c0_1 = arith.constant 0 : index
    %3 = vector.load %arg2[%c0, %c0_1] : memref<32x128xf32, #tpu.memory_space<vmem>>, vector<32x128xf32>
    %c0_2 = arith.constant 0 : index
    %c0_3 = arith.constant 0 : index
    %4 = vector.load %arg3[%c0_2, %c0_3] : memref<32x128xf32, #tpu.memory_space<vmem>>, vector<32x128xf32>
    %c0_4 = arith.constant 0 : index
    %c0_5 = arith.constant 0 : index
    %5 = vector.load %arg4[%c0_4, %c0_5] : memref<32x128xi8, #tpu.memory_space<vmem>>, vector<32x128xi8>
    %6 = arith.sitofp %5 : vector<32x128xi8> to vector<32x128xf32>
    %cst = arith.constant 0.000000e+00 : f32
    %7 = vector.broadcast %cst : f32 to vector<32x128xf32>
    %8 = arith.subf %7, %4 : vector<32x128xf32>
    %9 = arith.mulf %8, %3 : vector<32x128xf32>
    %cst_6 = arith.constant 5.000000e+01 : f32
    %10 = vector.broadcast %cst_6 : f32 to vector<32x128xf32>
    %11 = arith.cmpf ogt, %9, %10 : vector<32x128xf32>
    %12 = math.exp %9 : vector<32x128xf32>
    %13 = math.log1p %12 : vector<32x128xf32>
    %14 = arith.select %11, %9, %13 : vector<32x128xi1>, vector<32x128xf32>
    %cst_7 = arith.constant 3.000000e+00 : f32
    %15 = vector.broadcast %cst_7 : f32 to vector<32x128xf32>
    %16 = arith.cmpf oeq, %6, %15 : vector<32x128xf32>
    %17 = arith.extui %16 : vector<32x128xi1> to vector<32x128xi32>
    %18 = arith.sitofp %17 : vector<32x128xi32> to vector<32x128xf32>
    %cst_8 = arith.constant 0.000000e+00 : f32
    %19 = vector.broadcast %cst_8 : f32 to vector<32x128xf32>
    %20 = arith.cmpf oeq, %6, %19 : vector<32x128xf32>
    %21 = arith.extui %20 : vector<32x128xi1> to vector<32x128xi32>
    %22 = arith.sitofp %21 : vector<32x128xi32> to vector<32x128xf32>
    %c0_9 = arith.constant 0 : index
    %c0_10 = arith.constant 0 : index
    %23 = vector.load %arg6[%c0_9, %c0_10] : memref<8x128xf32, #tpu.memory_space<vmem>>, vector<8x128xf32>
    %24 = vector.shape_cast %14 : vector<32x128xf32> to vector<4x8x128xf32>
    %cst_11 = arith.constant dense<0.000000e+00> : vector<8x128xf32>
    %25 = vector.multi_reduction <add>, %24, %cst_11 [0] : vector<4x8x128xf32> to vector<8x128xf32>
    %26 = arith.addf %23, %25 : vector<8x128xf32>
    %c0_12 = arith.constant 0 : index
    %c0_13 = arith.constant 0 : index
    %27 = vector.load %arg6[%c0_12, %c0_13] : memref<8x128xf32, #tpu.memory_space<vmem>>, vector<8x128xf32>
    tpu.vector_store %arg6[%c0_12, %c0_13], %26 {strides = array<i32>} : memref<8x128xf32, #tpu.memory_space<vmem>>, vector<8x128xf32>,
    %c0_14 = arith.constant 0 : index
    %c0_15 = arith.constant 0 : index
    %28 = vector.load %arg7[%c0_14, %c0_15] : memref<8x128xf32, #tpu.memory_space<vmem>>, vector<8x128xf32>
    %29 = arith.mulf %14, %18 : vector<32x128xf32>
    %30 = vector.shape_cast %29 : vector<32x128xf32> to vector<4x8x128xf32>
    %cst_16 = arith.constant dense<0.000000e+00> : vector<8x128xf32>
    %31 = vector.multi_reduction <add>, %30, %cst_16 [0] : vector<4x8x128xf32> to vector<8x128xf32>
    %32 = arith.addf %28, %31 : vector<8x128xf32>
    %c0_17 = arith.constant 0 : index
    %c0_18 = arith.constant 0 : index
    %33 = vector.load %arg7[%c0_17, %c0_18] : memref<8x128xf32, #tpu.memory_space<vmem>>, vector<8x128xf32>
    tpu.vector_store %arg7[%c0_17, %c0_18], %32 {strides = array<i32>} : memref<8x128xf32, #tpu.memory_space<vmem>>, vector<8x128xf32>,
    %c0_19 = arith.constant 0 : index
    %c0_20 = arith.constant 0 : index
    %34 = vector.load %arg8[%c0_19, %c0_20] : memref<8x128xf32, #tpu.memory_space<vmem>>, vector<8x128xf32>
    %35 = arith.mulf %14, %22 : vector<32x128xf32>
    %36 = vector.shape_cast %35 : vector<32x128xf32> to vector<4x8x128xf32>
    %cst_21 = arith.constant dense<0.000000e+00> : vector<8x128xf32>
    %37 = vector.multi_reduction <add>, %36, %cst_21 [0] : vector<4x8x128xf32> to vector<8x128xf32>
    %38 = arith.addf %34, %37 : vector<8x128xf32>
    %c0_22 = arith.constant 0 : index
    %c0_23 = arith.constant 0 : index
    %39 = vector.load %arg8[%c0_22, %c0_23] : memref<8x128xf32, #tpu.memory_space<vmem>>, vector<8x128xf32>
    tpu.vector_store %arg8[%c0_22, %c0_23], %38 {strides = array<i32>} : memref<8x128xf32, #tpu.memory_space<vmem>>, vector<8x128xf32>,
    %c0_24 = arith.constant 0 : index
    %c0_25 = arith.constant 0 : index
    %40 = vector.load %arg9[%c0_24, %c0_25] : memref<8x128xf32, #tpu.memory_space<vmem>>, vector<8x128xf32>
    %41 = vector.shape_cast %18 : vector<32x128xf32> to vector<4x8x128xf32>
    %cst_26 = arith.constant dense<0.000000e+00> : vector<8x128xf32>
    %42 = vector.multi_reduction <add>, %41, %cst_26 [0] : vector<4x8x128xf32> to vector<8x128xf32>
    %43 = arith.addf %40, %42 : vector<8x128xf32>
    %c0_27 = arith.constant 0 : index
    %c0_28 = arith.constant 0 : index
    %44 = vector.load %arg9[%c0_27, %c0_28] : memref<8x128xf32, #tpu.memory_space<vmem>>, vector<8x128xf32>
    tpu.vector_store %arg9[%c0_27, %c0_28], %43 {strides = array<i32>} : memref<8x128xf32, #tpu.memory_space<vmem>>, vector<8x128xf32>,
    %c0_29 = arith.constant 0 : index
    %c0_30 = arith.constant 0 : index
    %45 = vector.load %arg10[%c0_29, %c0_30] : memref<8x128xf32, #tpu.memory_space<vmem>>, vector<8x128xf32>
    %46 = vector.shape_cast %22 : vector<32x128xf32> to vector<4x8x128xf32>
    %cst_31 = arith.constant dense<0.000000e+00> : vector<8x128xf32>
    %47 = vector.multi_reduction <add>, %46, %cst_31 [0] : vector<4x8x128xf32> to vector<8x128xf32>
    %48 = arith.addf %45, %47 : vector<8x128xf32>
    %c0_32 = arith.constant 0 : index
    %c0_33 = arith.constant 0 : index
    %49 = vector.load %arg10[%c0_32, %c0_33] : memref<8x128xf32, #tpu.memory_space<vmem>>, vector<8x128xf32>
    tpu.vector_store %arg10[%c0_32, %c0_33], %48 {strides = array<i32>} : memref<8x128xf32, #tpu.memory_space<vmem>>, vector<8x128xf32>,
    %c0_i32_34 = arith.constant 0 : i32
    %50 = arith.cmpi eq, %arg1, %c0_i32_34 : i32
    %51 = arith.extui %50 : i1 to i32
    %c0_i32_35 = arith.constant 0 : i32
    %52 = arith.cmpi ne, %51, %c0_i32_35 : i32
    scf.if %52 {
      %c0_36 = arith.constant 0 : index
      %c0_37 = arith.constant 0 : index
      %53 = vector.load %arg6[%c0_36, %c0_37] : memref<8x128xf32, #tpu.memory_space<vmem>>, vector<8x128xf32>
      %c0_38 = arith.constant 0 : index
      %c0_39 = arith.constant 0 : index
      %c0_40 = arith.constant 0 : index
      %c0_41 = arith.constant 0 : index
      %54 = vector.load %arg5[%c0_38, %c0_39, %c0_40, %c0_41] : memref<1x5x8x128xf32, #tpu.memory_space<vmem>>, vector<1x1x8x128xf32>
      %55 = vector.shape_cast %54 : vector<1x1x8x128xf32> to vector<8x128xf32>
      %56 = vector.shape_cast %53 : vector<8x128xf32> to vector<1x1x8x128xf32>
      tpu.vector_store %arg5[%c0_38, %c0_39, %c0_40, %c0_41], %56 {strides = array<i32>} : memref<1x5x8x128xf32, #tpu.memory_space<vmem>>, vector<1x1x8x128xf32>,
      %c0_42 = arith.constant 0 : index
      %c0_43 = arith.constant 0 : index
      %57 = vector.load %arg7[%c0_42, %c0_43] : memref<8x128xf32, #tpu.memory_space<vmem>>, vector<8x128xf32>
      %c0_44 = arith.constant 0 : index
      %c1 = arith.constant 1 : index
      %c0_45 = arith.constant 0 : index
      %c0_46 = arith.constant 0 : index
      %58 = vector.load %arg5[%c0_44, %c1, %c0_45, %c0_46] : memref<1x5x8x128xf32, #tpu.memory_space<vmem>>, vector<1x1x8x128xf32>
      %59 = vector.shape_cast %58 : vector<1x1x8x128xf32> to vector<8x128xf32>
      %60 = vector.shape_cast %57 : vector<8x128xf32> to vector<1x1x8x128xf32>
      tpu.vector_store %arg5[%c0_44, %c1, %c0_45, %c0_46], %60 {strides = array<i32>} : memref<1x5x8x128xf32, #tpu.memory_space<vmem>>, vector<1x1x8x128xf32>,
      %c0_47 = arith.constant 0 : index
      %c0_48 = arith.constant 0 : index
      %61 = vector.load %arg8[%c0_47, %c0_48] : memref<8x128xf32, #tpu.memory_space<vmem>>, vector<8x128xf32>
      %c0_49 = arith.constant 0 : index
      %c2 = arith.constant 2 : index
      %c0_50 = arith.constant 0 : index
      %c0_51 = arith.constant 0 : index
      %62 = vector.load %arg5[%c0_49, %c2, %c0_50, %c0_51] : memref<1x5x8x128xf32, #tpu.memory_space<vmem>>, vector<1x1x8x128xf32>
      %63 = vector.shape_cast %62 : vector<1x1x8x128xf32> to vector<8x128xf32>
      %64 = vector.shape_cast %61 : vector<8x128xf32> to vector<1x1x8x128xf32>
      tpu.vector_store %arg5[%c0_49, %c2, %c0_50, %c0_51], %64 {strides = array<i32>} : memref<1x5x8x128xf32, #tpu.memory_space<vmem>>, vector<1x1x8x128xf32>,
      %c0_52 = arith.constant 0 : index
      %c0_53 = arith.constant 0 : index
      %65 = vector.load %arg9[%c0_52, %c0_53] : memref<8x128xf32, #tpu.memory_space<vmem>>, vector<8x128xf32>
      %c0_54 = arith.constant 0 : index
      %c3 = arith.constant 3 : index
      %c0_55 = arith.constant 0 : index
      %c0_56 = arith.constant 0 : index
      %66 = vector.load %arg5[%c0_54, %c3, %c0_55, %c0_56] : memref<1x5x8x128xf32, #tpu.memory_space<vmem>>, vector<1x1x8x128xf32>
      %67 = vector.shape_cast %66 : vector<1x1x8x128xf32> to vector<8x128xf32>
      %68 = vector.shape_cast %65 : vector<8x128xf32> to vector<1x1x8x128xf32>
      tpu.vector_store %arg5[%c0_54, %c3, %c0_55, %c0_56], %68 {strides = array<i32>} : memref<1x5x8x128xf32, #tpu.memory_space<vmem>>, vector<1x1x8x128xf32>,
      %c0_57 = arith.constant 0 : index
      %c0_58 = arith.constant 0 : index
      %69 = vector.load %arg10[%c0_57, %c0_58] : memref<8x128xf32, #tpu.memory_space<vmem>>, vector<8x128xf32>
      %c0_59 = arith.constant 0 : index
      %c4 = arith.constant 4 : index
      %c0_60 = arith.constant 0 : index
      %c0_61 = arith.constant 0 : index
      %70 = vector.load %arg5[%c0_59, %c4, %c0_60, %c0_61] : memref<1x5x8x128xf32, #tpu.memory_space<vmem>>, vector<1x1x8x128xf32>
      %71 = vector.shape_cast %70 : vector<1x1x8x128xf32> to vector<8x128xf32>
      %72 = vector.shape_cast %69 : vector<8x128xf32> to vector<1x1x8x128xf32>
      tpu.vector_store %arg5[%c0_59, %c4, %c0_60, %c0_61], %72 {strides = array<i32>} : memref<1x5x8x128xf32, #tpu.memory_space<vmem>>, vector<1x1x8x128xf32>,
    } else {
    }
    return
  }
  func.func @transform_0(%arg0: i32, %arg1: i32) -> (i32, i32) {
    %c1_i32 = arith.constant 1 : i32
    %0 = arith.muli %arg0, %c1_i32 : i32
    %1 = arith.addi %0, %arg1 : i32
    %c0_i32 = arith.constant 0 : i32
    %c0_i32_0 = arith.constant 0 : i32
    return %1, %c0_i32 : i32, i32
  }
  func.func @transform_1(%arg0: i32, %arg1: i32) -> (i32, i32) {
    %c1_i32 = arith.constant 1 : i32
    %0 = arith.muli %arg0, %c1_i32 : i32
    %1 = arith.addi %0, %arg1 : i32
    %c0_i32 = arith.constant 0 : i32
    %c0_i32_0 = arith.constant 0 : i32
    return %1, %c0_i32 : i32, i32
  }
  func.func @transform_2(%arg0: i32, %arg1: i32) -> (i32, i32) {
    %c1_i32 = arith.constant 1 : i32
    %0 = arith.muli %arg0, %c1_i32 : i32
    %1 = arith.addi %0, %arg1 : i32
    %c0_i32 = arith.constant 0 : i32
    %c0_i32_0 = arith.constant 0 : i32
    return %1, %c0_i32 : i32, i32
  }
  func.func @transform_3(%arg0: i32, %arg1: i32) -> (i32, i32, i32, i32) {
    %c0_i32 = arith.constant 0 : i32
    %c0_i32_0 = arith.constant 0 : i32
    %c0_i32_1 = arith.constant 0 : i32
    %c0_i32_2 = arith.constant 0 : i32
    return %arg0, %c0_i32, %c0_i32_0, %c0_i32_1 : i32, i32, i32, i32
  }
}

</mosaic_0001>

<llo_original>
// kernel: tpu_custom_call.1
$region0: #{tpu_custom_call.1}
  #allocation0 [shape = 'u32[]', space=smem, size = 0x4, offset = 0x4, fixed_abs, tag = 'smem constant byte address 0x4 - core index']
  #allocation1 [shape = 'u32[72,128]{1,0:T(1,128)}', space=vmem, size = 0x9000, scoped, tag = 'internal scratch']
  #allocation2 [shape = 'f32[8,128]{1,0:T(8,128)}', space=vmem, size = 0x1000, scoped, tag = 'scratch operand']
  #allocation3 [shape = 'f32[8,128]{1,0:T(8,128)}', space=vmem, size = 0x1000, scoped, tag = 'scratch operand']
  #allocation4 [shape = 'f32[8,128]{1,0:T(8,128)}', space=vmem, size = 0x1000, scoped, tag = 'scratch operand']
  #allocation5 [shape = 'f32[8,128]{1,0:T(8,128)}', space=vmem, size = 0x1000, scoped, tag = 'scratch operand']
  #allocation6 [shape = 'f32[8,128]{1,0:T(8,128)}', space=vmem, size = 0x1000, scoped, tag = 'scratch operand']
  %s0 = inlined_call_operand.hbm [shape: f32[64,128], index: 0, kind: input, shape index: {}]
  %s1 = inlined_call_operand.hbm [shape: f32[64,128], index: 1, kind: input, shape index: {}]
  %s2 = inlined_call_operand.hbm [shape: s8[64,128], index: 2, kind: input, shape index: {}]
  %s3 = inlined_call_operand.hbm [shape: f32[2,5,8,128], index: 3, kind: output, shape index: {}]
  %s4 = sld [smem:[#allocation0]]
  $region65: #{tpu_custom_call.1} parent=0
    _
  %s6 = ssub.s32 1, %s4
  %s7 = scalar_select 0, %s6, %s4
  $region1: #{tpu_custom_call.1} parent=0
    #allocation7 [shape = 'u8[32768]{0}', space=vmem, size = 0x8000, scoped, tag = 'input window, operand 0']
    #allocation8 [shape = 's32[2]{0}', space=sflag, size = 0x8, scoped, tag = 'scoped memory for tpu_custom_call.1']
    #allocation9 [shape = 's32[2]{0}', space=sflag, size = 0x8, scoped, tag = 'scoped memory for tpu_custom_call.1']
    #allocation10 [shape = 'u8[32768]{0}', space=vmem, size = 0x8000, scoped, tag = 'input window, operand 1']
    #allocation11 [shape = 's32[2]{0}', space=sflag, size = 0x8, scoped, tag = 'scoped memory for tpu_custom_call.1']
    #allocation12 [shape = 'u8[8192]{0}', space=vmem, size = 0x2000, scoped, tag = 'input window, operand 2']
    #allocation13 [shape = 'u8[40960]{0}', space=vmem, size = 0xa000, scoped, tag = 'output window, operand 0']
    %8 = vsyncpa [#allocation8], 0
    %s9 = scalar_lea.sflag [#allocation8], 1
    %10 = vsyncpa %s9, 0
    %11 = vsyncpa [#allocation11], 0
    %s12 = scalar_lea.sflag [#allocation11], 1
    %13 = vsyncpa %s12, 0
    %14 = vsyncpa [#allocation9], 0
    %s15 = scalar_lea.sflag [#allocation9], 1
    %16 = vsyncpa %s15, 0
    loop: start=0, step=1, limit=4
    $region2: #{tpu_custom_call.1} parent=1 // loop_pre_header
      _
    $region3: #{tpu_custom_call.1} parent=1 // loop_header
      %s18 = sphi 0, %s22
      %p19 = scmp.ge.s32.totalorder %s18, 4
      %s25 = sphi 0, %s37
      %s26 = sphi 0, %s33
      %s27 = sphi 0, %s25
      %s28 = sphi 0, %s26
      %s29 = sphi 0, %s27
      %s30 = sphi 0, %s28
      %s42 = sphi 0, %s44
      %s45 = sphi 0, %s42
      %s46 = sphi 0, %s45
      %s62 = sphi 0, %s46
      %s70 = sphi 0, %s72
      %s73 = sphi 0, %s70
      %s74 = sphi 0, %s73
      %s90 = sphi 0, %s74
      %s98 = sphi 0, %s100
      %s101 = sphi 0, %s98
      %s102 = sphi 0, %s101
      %s118 = sphi 0, %s102
      %s124 = sphi 0, %s126
      %s127 = sphi 0, %s124
      %s128 = sphi 0, %s127
      %s144 = sphi 0, %s128
    $region4: #{tpu_custom_call.1} parent=1 // loop_header_branch
      %21 = sbr.rel (%p19) target = $region8
    $region5: #{tpu_custom_call.1} parent=1 // loop_body
      %s23 = ssub.s32 %s18, 1
      %s24 = ssub.s32 %s18, 2
      %s31 = sadd.s32 1, %s26
      %p32 = scmp.ge.s32.totalorder %s31, 1
      %s33 = scalar_select %p32, 0, %s31
      %s34 = sadd.s32 1, %s25
      %s35 = scalar_select %p32, %s34, %s25
      %p36 = scmp.ge.s32.totalorder %s35, 2
      %s37 = scalar_select %p36, 0, %s35
      %s38 = sadd.s32 %s25, %s26
      %s39 = sadd.s32 %s37, %s33
      %s40 = ssub.s32 %s38, %s39
      %p41 = scmp.eq.s32.totalorder %s40, 0
      %s43 = sadd.s32 %s42, 1
      %s44 = scalar_select %p41, %s42, %s43
      %p47 = pneg %p41
      %p48 = scmp.eq.s32.totalorder %s18, 1
      %p49 = por %p47, %p48
      %p50 = scmp.ne.s32.totalorder %s42, %s45
      %p51 = scmp.eq.s32.totalorder %s18, 0
      %p52 = por %p50, %p51
      %p53 = scmp.ne.s32.totalorder %s42, %s45
      %p54 = scmp.eq.s32.totalorder %s23, 1
      %p55 = por %p53, %p54
      %p56 = scmp.ne.s32.totalorder %s45, %s46
      %p57 = scmp.eq.s32.totalorder %s23, 0
      %p58 = por %p56, %p57
      %p59 = scmp.ne.s32.totalorder %s45, %s46
      %p60 = scmp.eq.s32.totalorder %s24, 1
      %p61 = por %p59, %p60
      %p63 = scmp.ne.s32.totalorder %s46, %s62
      %p64 = scmp.eq.s32.totalorder %s24, 0
      %p65 = por %p63, %p64
      %s66 = sadd.s32 %s25, %s26
      %s67 = sadd.s32 %s37, %s33
      %s68 = ssub.s32 %s66, %s67
      %p69 = scmp.eq.s32.totalorder %s68, 0
      %s71 = sadd.s32 %s70, 1
      %s72 = scalar_select %p69, %s70, %s71
      %p75 = pneg %p69
      %p76 = scmp.eq.s32.totalorder %s18, 1
      %p77 = por %p75, %p76
      %p78 = scmp.ne.s32.totalorder %s70, %s73
      %p79 = scmp.eq.s32.totalorder %s18, 0
      %p80 = por %p78, %p79
      %p81 = scmp.ne.s32.totalorder %s70, %s73
      %p82 = scmp.eq.s32.totalorder %s23, 1
      %p83 = por %p81, %p82
      %p84 = scmp.ne.s32.totalorder %s73, %s74
      %p85 = scmp.eq.s32.totalorder %s23, 0
      %p86 = por %p84, %p85
      %p87 = scmp.ne.s32.totalorder %s73, %s74
      %p88 = scmp.eq.s32.totalorder %s24, 1
      %p89 = por %p87, %p88
      %p91 = scmp.ne.s32.totalorder %s74, %s90
      %p92 = scmp.eq.s32.totalorder %s24, 0
      %p93 = por %p91, %p92
      %s94 = sadd.s32 %s25, %s26
      %s95 = sadd.s32 %s37, %s33
      %s96 = ssub.s32 %s94, %s95
      %p97 = scmp.eq.s32.totalorder %s96, 0
      %s99 = sadd.s32 %s98, 1
      %s100 = scalar_select %p97, %s98, %s99
      %p103 = pneg %p97
      %p104 = scmp.eq.s32.totalorder %s18, 1
      %p105 = por %p103, %p104
      %p106 = scmp.ne.s32.totalorder %s98, %s101
      %p107 = scmp.eq.s32.totalorder %s18, 0
      %p108 = por %p106, %p107
      %p109 = scmp.ne.s32.totalorder %s98, %s101
      %p110 = scmp.eq.s32.totalorder %s23, 1
      %p111 = por %p109, %p110
      %p112 = scmp.ne.s32.totalorder %s101, %s102
      %p113 = scmp.eq.s32.totalorder %s23, 0
      %p114 = por %p112, %p113
      %p115 = scmp.ne.s32.totalorder %s101, %s102
      %p116 = scmp.eq.s32.totalorder %s24, 1
      %p117 = por %p115, %p116
      %p119 = scmp.ne.s32.totalorder %s102, %s118
      %p120 = scmp.eq.s32.totalorder %s24, 0
      %p121 = por %p119, %p120
      %s122 = ssub.s32 %s25, %s37
      %p123 = scmp.eq.s32.totalorder %s122, 0
      %s125 = sadd.s32 %s124, 1
      %s126 = scalar_select %p123, %s124, %s125
      %p129 = pneg %p123
      %p130 = scmp.eq.s32.totalorder %s18, 1
      %p131 = por %p129, %p130
      %p132 = scmp.ne.s32.totalorder %s124, %s127
      %p133 = scmp.eq.s32.totalorder %s18, 0
      %p134 = por %p132, %p133
      %p135 = scmp.ne.s32.totalorder %s124, %s127
      %p136 = scmp.eq.s32.totalorder %s23, 1
      %p137 = por %p135, %p136
      %p138 = scmp.ne.s32.totalorder %s127, %s128
      %p139 = scmp.eq.s32.totalorder %s23, 0
      %p140 = por %p138, %p139
      %p141 = scmp.ne.s32.totalorder %s127, %s128
      %p142 = scmp.eq.s32.totalorder %s24, 1
      %p143 = por %p141, %p142
      %p145 = scmp.ne.s32.totalorder %s128, %s144
      %p146 = scmp.eq.s32.totalorder %s24, 0
      %p147 = por %p145, %p146
      %p148 = scmp.le.s32.totalorder 1, %s18
      %p149 = scmp.lt.s32.totalorder %s18, 3
      %p150 = pnand %p148, %p149
      %p151 = pneg %p150
      // Predicated region
      $region9: #{tpu_custom_call.1} parent=5 // pred_check
        _
      $region10: #{tpu_custom_call.1} parent=5 // pred_check_branch
        %153 = sbr.rel (%p150) target = $region12
      $region11: #{tpu_custom_call.1} parent=5 // pred_region
        %s154 = ssub.s32 %s18, 1
      $region12: #{tpu_custom_call.1} parent=5 // pred_fallthru
        _
      %p155 = scmp.lt.s32.totalorder %s18, 2
      // Predicated region
      $region13: #{tpu_custom_call.1} parent=5 // pred_check
        %p156 = pneg %p155
      $region14: #{tpu_custom_call.1} parent=5 // pred_check_branch
        %158 = sbr.rel (%p156) target = $region16
      $region15: #{tpu_custom_call.1} parent=5 // pred_region
        // Predicated region
        $region17: #{tpu_custom_call.1} parent=15 // pred_check
          %p159 = pneg %p52
        $region18: #{tpu_custom_call.1} parent=15 // pred_check_branch
          %161 = sbr.rel (%p159) target = $region20
        $region19: #{tpu_custom_call.1} parent=15 // pred_region
          %s162 = sand.u32 %s42, 1
          %s163 = scalar_lea.sflag [#allocation8], %s162
          %s164 = sand.u32 %s42, 1
          %s165 = smul.addr %s164, 32
          %s166 = scalar_lea.vmem [#allocation7], %s165
          %s167 = sadd.s32 %s25, %s26
          %s168 = smul.u32 4, %s167
          %170 = vsyncadd %s163, 0
          %s171 = smul.addr %s168, 8
          %s172 = scalar_lea.hbm %s0, %s171
          %s173 = sshll.u32 %s172, 4
          %s174 = int_to_ptr.hbm [resolvable:$true] %s173
          %s175 = sshll.u32 %s166, 4
          %s176 = int_to_ptr.vmem [resolvable:$true] %s175
          %181 = dma.hbm_to_vmem [thread:$0]  %s174, 512, %s176, %s163, 128, 128, 8
        $region20: #{tpu_custom_call.1} parent=15 // pred_fallthru
          _
        // Predicated region
        $region21: #{tpu_custom_call.1} parent=15 // pred_check
          %p182 = pneg %p80
        $region22: #{tpu_custom_call.1} parent=15 // pred_check_branch
          %184 = sbr.rel (%p182) target = $region24
        $region23: #{tpu_custom_call.1} parent=15 // pred_region
          %s185 = sand.u32 %s18, 1
          %s186 = scalar_lea.sflag [#allocation11], %s185
          %s187 = sand.u32 %s70, 1
          %s188 = smul.addr %s187, 32
          %s189 = scalar_lea.vmem [#allocation10], %s188
          %s190 = sadd.s32 %s25, %s26
          %s191 = smul.u32 4, %s190
          %193 = vsyncadd %s186, 0
          %s194 = smul.addr %s191, 8
          %s195 = scalar_lea.hbm %s1, %s194
          %s196 = sshll.u32 %s195, 4
          %s197 = int_to_ptr.hbm [resolvable:$true] %s196
          %s198 = sshll.u32 %s189, 4
          %s199 = int_to_ptr.vmem [resolvable:$true] %s198
          %204 = dma.hbm_to_vmem [thread:$0]  %s197, 512, %s199, %s186, 128, 128, 8
        $region24: #{tpu_custom_call.1} parent=15 // pred_fallthru
          _
        // Predicated region
        $region25: #{tpu_custom_call.1} parent=15 // pred_check
          %p205 = pneg %p108
        $region26: #{tpu_custom_call.1} parent=15 // pred_check_branch
          %207 = sbr.rel (%p205) target = $region28
        $region27: #{tpu_custom_call.1} parent=15 // pred_region
          %s208 = sand.u32 %s18, 1
          %s209 = scalar_lea.sflag [#allocation11], %s208
          %s210 = sand.u32 %s98, 1
          %s211 = smul.addr %s210, 8
          %s212 = scalar_lea.vmem [#allocation12], %s211
          %s213 = sadd.s32 %s25, %s26
          %215 = vsyncadd %s209, 0
          %s216 = smul.addr %s213, 8
          %s217 = scalar_lea.hbm %s2, %s216
          %s219 = sshll.u32 %s217, 4
          %s220 = int_to_ptr.hbm [resolvable:$true] %s219
          %s221 = sshll.u32 %s212, 4
          %s222 = int_to_ptr.vmem [resolvable:$true] %s221
          %224 = dma.hbm_to_vmem [thread:$0]  %s220, 128, %s222, %s209
        $region28: #{tpu_custom_call.1} parent=15 // pred_fallthru
          _
      $region16: #{tpu_custom_call.1} parent=5 // pred_fallthru
        _
      %p225 = scmp.le.s32.totalorder 1, %s18
      %p226 = scmp.lt.s32.totalorder %s18, 3
      %p227 = pnand %p225, %p226
      %p228 = pneg %p227
      // Predicated region
      $region29: #{tpu_custom_call.1} parent=5 // pred_check
        _
      $region30: #{tpu_custom_call.1} parent=5 // pred_check_branch
        %230 = sbr.rel (%p227) target = $region32
      $region31: #{tpu_custom_call.1} parent=5 // pred_region
        %s231 = ssub.s32 %s18, 1
        %s232 = sand.u32 %s45, 1
        %s233 = scalar_lea.sflag [#allocation8], %s232
        %s234 = sand.u32 %s45, 1
        %s235 = smul.addr %s234, 32
        %s236 = scalar_lea.vmem [#allocation7], %s235
        // Predicated region
        $region33: #{tpu_custom_call.1} parent=31 // pred_check
          %p237 = pneg %p58
        $region34: #{tpu_custom_call.1} parent=31 // pred_check_branch
          %239 = sbr.rel (%p237) target = $region36
        $region35: #{tpu_custom_call.1} parent=31 // pred_region
          %241 = dma.done %s233, 512
        $region36: #{tpu_custom_call.1} parent=31 // pred_fallthru
          _
        %s242 = sand.u32 %s23, 1
        %s243 = scalar_lea.sflag [#allocation11], %s242
        %s244 = sand.u32 %s73, 1
        %s245 = smul.addr %s244, 32
        %s246 = scalar_lea.vmem [#allocation10], %s245
        // Predicated region
        $region37: #{tpu_custom_call.1} parent=31 // pred_check
          %p247 = pneg %p86
        $region38: #{tpu_custom_call.1} parent=31 // pred_check_branch
          %249 = sbr.rel (%p247) target = $region40
        $region39: #{tpu_custom_call.1} parent=31 // pred_region
          %251 = dma.done %s243, 512
        $region40: #{tpu_custom_call.1} parent=31 // pred_fallthru
          _
        %s252 = sand.u32 %s23, 1
        %s253 = scalar_lea.sflag [#allocation11], %s252
        %s254 = sand.u32 %s101, 1
        %s255 = smul.addr %s254, 8
        %s256 = scalar_lea.vmem [#allocation12], %s255
        // Predicated region
        $region41: #{tpu_custom_call.1} parent=31 // pred_check
          %p257 = pneg %p114
        $region42: #{tpu_custom_call.1} parent=31 // pred_check_branch
          %259 = sbr.rel (%p257) target = $region44
        $region43: #{tpu_custom_call.1} parent=31 // pred_region
          %261 = dma.done %s253, 128
        $region44: #{tpu_custom_call.1} parent=31 // pred_fallthru
          _
        %s262 = sand.u32 %s45, 1
        %s263 = scalar_lea.sflag [#allocation8], %s262
        %s264 = sand.u32 %s45, 1
        %s265 = smul.addr %s264, 32
        %s266 = scalar_lea.vmem [#allocation7], %s265
        %p267 = pneg %p58
        %p268 = pneg %p55
        %s269 = sand.u32 %s23, 1
        %s270 = scalar_lea.sflag [#allocation11], %s269
        %s271 = sand.u32 %s73, 1
        %s272 = smul.addr %s271, 32
        %s273 = scalar_lea.vmem [#allocation10], %s272
        %p274 = pneg %p86
        %p275 = pneg %p83
        %s276 = sand.u32 %s23, 1
        %s277 = scalar_lea.sflag [#allocation11], %s276
        %s278 = sand.u32 %s101, 1
        %s279 = smul.addr %s278, 8
        %s280 = scalar_lea.vmem [#allocation12], %s279
        %p281 = pneg %p114
        %p282 = pneg %p111
        %p283 = pneg %p140
        %p284 = pneg %p137
        %s285 = sand.u32 %s127, 1
        %s286 = scalar_lea.sflag [#allocation9], %s285
        %s287 = sand.u32 %s127, 1
        %s288 = smul.addr %s287, 40
        %s289 = scalar_lea.vmem [#allocation13], %s288
        %s290 = sadd.s32 %s27, %s28
        %s291 = smul.u32 4, %s290
        %s292 = sadd.s32 %s27, %s28
        %s293 = smul.u32 4, %s292
        %s294 = sadd.s32 %s27, %s28
        %p295 = scmp.eq.s32.totalorder %s28, 0
        // Predicated region
        $region45: #{tpu_custom_call.1} parent=31 // pred_check
          %p296 = pneg %p295
        $region46: #{tpu_custom_call.1} parent=31 // pred_check_branch
          %298 = sbr.rel (%p296) target = $region48
        $region47: #{tpu_custom_call.1} parent=31 // pred_region
          %299 = vst [vmem:[#allocation2] sm:$0xff] 0.0
          %300 = vst [vmem:[#allocation3] sm:$0xff] 0.0
          %301 = vst [vmem:[#allocation4] sm:$0xff] 0.0
          %302 = vst [vmem:[#allocation5] sm:$0xff] 0.0
          %303 = vst [vmem:[#allocation6] sm:$0xff] 0.0
        $region48: #{tpu_custom_call.1} parent=31 // pred_fallthru
          _
        %v304 = vld [vmem:[%s236] sm:$0xff]
        %v305 = vld [vmem:[%s236 + $0x8] sm:$0xff]
        %v306 = vld [vmem:[%s236 + $0x10] sm:$0xff]
        %v307 = vld [vmem:[%s236 + $0x18] sm:$0xff]
        %v308 = vld [vmem:[%s246] sm:$0xff]
        %v309 = vld [vmem:[%s246 + $0x8] sm:$0xff]
        %v310 = vld [vmem:[%s246 + $0x10] sm:$0xff]
        %v311 = vld [vmem:[%s246 + $0x18] sm:$0xff]
        %v312 = vld [vmem:[%s256] sm:$0xff]
        %v313 = vunpack.c.0.s8 %v312
        %v314 = vunpack.c.1.s8 %v312
        %v315 = vunpack.c.2.s8 %v312
        %v316 = vunpack.c.3.s8 %v312
        %v317 = vcvt.s32.f32 %v313
        %v318 = vcvt.s32.f32 %v314
        %v319 = vcvt.s32.f32 %v315
        %v320 = vcvt.s32.f32 %v316
        %v321 = vsub.f32 0.0, %v308
        %v322 = vsub.f32 0.0, %v309
        %v323 = vsub.f32 0.0, %v310
        %v324 = vsub.f32 0.0, %v311
        %v325 = vmul.f32 %v321, %v304
        %v326 = vmul.f32 %v322, %v305
        %v327 = vmul.f32 %v323, %v306
        %v328 = vmul.f32 %v324, %v307
        %vm329 = vcmp.gt.f32.partialorder %v325, 50.0
        %vm330 = vcmp.gt.f32.partialorder %v326, 50.0
        %vm331 = vcmp.gt.f32.partialorder %v327, 50.0
        %vm332 = vcmp.gt.f32.partialorder %v328, 50.0
        %v333 = vmul.f32 %v325, 1.442695
        %v334 = vpow.pop %v333
        %v335 = vmul.f32 %v326, 1.442695
        %v336 = vpow.pop %v335
        %v337 = vmul.f32 %v327, 1.442695
        %v338 = vpow.pop %v337
        %v339 = vmul.f32 %v328, 1.442695
        %v340 = vpow.pop %v339
        %v341 = vadd.f32 %v334, 1.0
        %v342 = vlog2.pop %v341
        %v343 = vmul.f32 %v342, 0.6931472
        %v344 = vmul.f32 -0.5, %v334
        %v345 = vadd.f32 %v344, 1.0
        %v346 = vmul.f32 %v345, %v334
        %v347 = vand.u32 2147483647, %v334
        %vm348 = vcmp.lt.f32.partialorder %v347, 0.0004427343
        %v349 = vsel %vm348, %v346, %v343
        %v350 = vadd.f32 %v336, 1.0
        %v351 = vlog2.pop %v350
        %v352 = vmul.f32 %v351, 0.6931472
        %v353 = vmul.f32 -0.5, %v336
        %v354 = vadd.f32 %v353, 1.0
        %v355 = vmul.f32 %v354, %v336
        %v356 = vand.u32 2147483647, %v336
        %vm357 = vcmp.lt.f32.partialorder %v356, 0.0004427343
        %v358 = vsel %vm357, %v355, %v352
        %v359 = vadd.f32 %v338, 1.0
        %v360 = vlog2.pop %v359
        %v361 = vmul.f32 %v360, 0.6931472
        %v362 = vmul.f32 -0.5, %v338
        %v363 = vadd.f32 %v362, 1.0
        %v364 = vmul.f32 %v363, %v338
        %v365 = vand.u32 2147483647, %v338
        %vm366 = vcmp.lt.f32.partialorder %v365, 0.0004427343
        %v367 = vsel %vm366, %v364, %v361
        %v368 = vadd.f32 %v340, 1.0
        %v369 = vlog2.pop %v368
        %v370 = vmul.f32 %v369, 0.6931472
        %v371 = vmul.f32 -0.5, %v340
        %v372 = vadd.f32 %v371, 1.0
        %v373 = vmul.f32 %v372, %v340
        %v374 = vand.u32 2147483647, %v340
        %vm375 = vcmp.lt.f32.partialorder %v374, 0.0004427343
        %v376 = vsel %vm375, %v373, %v370
        %v377 = vsel %vm329, %v325, %v349
        %v378 = vsel %vm330, %v326, %v358
        %v379 = vsel %vm331, %v327, %v367
        %v380 = vsel %vm332, %v328, %v376
        %vm381 = vcmp.eq.f32.partialorder %v317, 3.0
        %vm382 = vcmp.eq.f32.partialorder %v318, 3.0
        %vm383 = vcmp.eq.f32.partialorder %v319, 3.0
        %vm384 = vcmp.eq.f32.partialorder %v320, 3.0
        %v385 = vsel %vm381, 1, 0
        %v386 = vsel %vm382, 1, 0
        %v387 = vsel %vm383, 1, 0
        %v388 = vsel %vm384, 1, 0
        %v389 = vcvt.s32.f32 %v385
        %v390 = vcvt.s32.f32 %v386
        %v391 = vcvt.s32.f32 %v387
        %v392 = vcvt.s32.f32 %v388
        %vm393 = vcmp.eq.f32.partialorder %v317, 0.0
        %vm394 = vcmp.eq.f32.partialorder %v318, 0.0
        %vm395 = vcmp.eq.f32.partialorder %v319, 0.0
        %vm396 = vcmp.eq.f32.partialorder %v320, 0.0
        %v397 = vsel %vm393, 1, 0
        %v398 = vsel %vm394, 1, 0
        %v399 = vsel %vm395, 1, 0
        %v400 = vsel %vm396, 1, 0
        %v401 = vcvt.s32.f32 %v397
        %v402 = vcvt.s32.f32 %v398
        %v403 = vcvt.s32.f32 %v399
        %v404 = vcvt.s32.f32 %v400
        %v405 = vld [vmem:[#allocation2] sm:$0xff]
        %v406 = vadd.f32 %v377, %v378
        %v407 = vadd.f32 %v406, %v379
        %v408 = vadd.f32 %v407, %v380
        %v409 = vadd.f32 %v405, %v408
        %410 = vst [vmem:[#allocation2] sm:$0xff] %v409
        %v411 = vld [vmem:[#allocation3] sm:$0xff]
        %v412 = vmul.f32 %v377, %v389
        %v413 = vmul.f32 %v378, %v390
        %v414 = vmul.f32 %v379, %v391
        %v415 = vmul.f32 %v380, %v392
        %v416 = vadd.f32 %v412, %v413
        %v417 = vadd.f32 %v416, %v414
        %v418 = vadd.f32 %v417, %v415
        %v419 = vadd.f32 %v411, %v418
        %420 = vst [vmem:[#allocation3] sm:$0xff] %v419
        %v421 = vld [vmem:[#allocation4] sm:$0xff]
        %v422 = vmul.f32 %v377, %v401
        %v423 = vmul.f32 %v378, %v402
        %v424 = vmul.f32 %v379, %v403
        %v425 = vmul.f32 %v380, %v404
        %v426 = vadd.f32 %v422, %v423
        %v427 = vadd.f32 %v426, %v424
        %v428 = vadd.f32 %v427, %v425
        %v429 = vadd.f32 %v421, %v428
        %430 = vst [vmem:[#allocation4] sm:$0xff] %v429
        %v431 = vld [vmem:[#allocation5] sm:$0xff]
        %v432 = vadd.f32 %v389, %v390
        %v433 = vadd.f32 %v432, %v391
        %v434 = vadd.f32 %v433, %v392
        %v435 = vadd.f32 %v431, %v434
        %436 = vst [vmem:[#allocation5] sm:$0xff] %v435
        %v437 = vld [vmem:[#allocation6] sm:$0xff]
        %v438 = vadd.f32 %v401, %v402
        %v439 = vadd.f32 %v438, %v403
        %v440 = vadd.f32 %v439, %v404
        %v441 = vadd.f32 %v437, %v440
        %442 = vst [vmem:[#allocation6] sm:$0xff] %v441
        // Predicated region
        $region49: #{tpu_custom_call.1} parent=31 // pred_check
          %p443 = pneg %p295
        $region50: #{tpu_custom_call.1} parent=31 // pred_check_branch
          %445 = sbr.rel (%p443) target = $region52
        $region51: #{tpu_custom_call.1} parent=31 // pred_region
          %v446 = vld [vmem:[#allocation2] sm:$0xff]
          %447 = vst [vmem:[%s289] sm:$0xff] %v446
          %v448 = vld [vmem:[#allocation3] sm:$0xff]
          %s449 = scalar_lea.vmem %s289, 8 [#allocation13]
          %450 = vst [vmem:[%s449] sm:$0xff] %v448
          %v451 = vld [vmem:[#allocation4] sm:$0xff]
          %s452 = scalar_lea.vmem %s289, 16 [#allocation13]
          %453 = vst [vmem:[%s452] sm:$0xff] %v451
          %v454 = vld [vmem:[#allocation5] sm:$0xff]
          %s455 = scalar_lea.vmem %s289, 24 [#allocation13]
          %456 = vst [vmem:[%s455] sm:$0xff] %v454
          %v457 = vld [vmem:[#allocation6] sm:$0xff]
          %s458 = scalar_lea.vmem %s289, 32 [#allocation13]
          %459 = vst [vmem:[%s458] sm:$0xff] %v457
        $region52: #{tpu_custom_call.1} parent=31 // pred_fallthru
          _
        %s460 = sand.u32 %s127, 1
        %s461 = scalar_lea.sflag [#allocation9], %s460
        %s462 = sand.u32 %s127, 1
        %s463 = smul.addr %s462, 40
        %s464 = scalar_lea.vmem [#allocation13], %s463
        // Predicated region
        $region53: #{tpu_custom_call.1} parent=31 // pred_check
          %p465 = pneg %p137
        $region54: #{tpu_custom_call.1} parent=31 // pred_check_branch
          %467 = sbr.rel (%p465) target = $region56
        $region55: #{tpu_custom_call.1} parent=31 // pred_region
          %469 = vsyncadd %s461, 0
          %s470 = smul.addr %s27, 5
          %s471 = smul.addr %s470, 8
          %s472 = scalar_lea.hbm %s3, %s471
          %s473 = sshll.u32 %s464, 4
          %s474 = int_to_ptr.vmem [resolvable:$true] %s473
          %s475 = sshll.u32 %s472, 4
          %s476 = int_to_ptr.hbm [resolvable:$true] %s475
          %481 = dma.vmem_to_hbm [thread:$0]  %s474, 640, %s476, %s461, 128, 128, 8
        $region56: #{tpu_custom_call.1} parent=31 // pred_fallthru
          _
      $region32: #{tpu_custom_call.1} parent=5 // pred_fallthru
        _
      %p482 = scmp.le.s32.totalorder 2, %s18
      // Predicated region
      $region57: #{tpu_custom_call.1} parent=5 // pred_check
        %p483 = pneg %p482
      $region58: #{tpu_custom_call.1} parent=5 // pred_check_branch
        %485 = sbr.rel (%p483) target = $region60
      $region59: #{tpu_custom_call.1} parent=5 // pred_region
        %s486 = ssub.s32 %s18, 2
        // Predicated region
        $region61: #{tpu_custom_call.1} parent=59 // pred_check
          %p487 = pneg %p143
        $region62: #{tpu_custom_call.1} parent=59 // pred_check_branch
          %489 = sbr.rel (%p487) target = $region64
        $region63: #{tpu_custom_call.1} parent=59 // pred_region
          %s490 = sand.u32 %s128, 1
          %s491 = scalar_lea.sflag [#allocation9], %s490
          %s492 = sand.u32 %s128, 1
          %s493 = smul.addr %s492, 40
          %s494 = scalar_lea.vmem [#allocation13], %s493
          %496 = dma.done %s491, 640
        $region64: #{tpu_custom_call.1} parent=59 // pred_fallthru
          _
      $region60: #{tpu_custom_call.1} parent=5 // pred_fallthru
        _
    $region6: #{tpu_custom_call.1} parent=1 // loop_footer
      %s22 = sadd.s32 1, %s18
    $region7: #{tpu_custom_call.1} parent=1 // loop_footer_branch
      %17 = sbr.rel target = $region3
    $region8: #{tpu_custom_call.1} parent=1 // loop_exit
      _
    %497 = vsyncpa [#allocation8], 1
    %s498 = scalar_lea.sflag [#allocation8], 1
    %499 = vsyncpa %s498, 1
    %500 = vsyncpa [#allocation11], 1
    %s501 = scalar_lea.sflag [#allocation11], 1
    %502 = vsyncpa %s501, 1
    %503 = vsyncpa [#allocation9], 1
    %s504 = scalar_lea.sflag [#allocation9], 1
    %505 = vsyncpa %s504, 1

</llo_original>
